<compile_context>
chip_gen: v6e
topology: v6e:2x2x1
jax: 0.10.0
libtpu: 0.0.40
codegen_flags: <defaults>
</compile_context>

<pallas_src>
import jax
import jax.numpy as jnp
from jax.experimental import pallas as pl
from jax.experimental.pallas import tpu as pltpu


def _round_up(x, m):
    return ((x + m - 1) // m) * m


def _cdiv(a, b):
    return -(-a // b)


def _encoder_kernel(xT_ref, w1T_ref, b1_ref, w2T_ref, o_ref):
    """One M-tile of the fused encoder.

    xT_ref : (D0, TM)  input tile, M on the 128-lane axis (lane-dense loads)
    w1T_ref: (D1, D0)  first-layer weight, transposed (VMEM-resident)
    b1_ref : (D1, 1)   first-layer bias
    w2T_ref: (D2, D1)  second-layer weight, transposed (VMEM-resident)
    o_ref  : (TM, D2)  output tile in natural row-major layout
    """
    xT = xT_ref[...]                     # (D0, TM)
    w1T = w1T_ref[...]                   # (D1, D0)
    d0 = xT_ref.shape[0]

    # Layer 0 (Linear + bias + ReLU) on the VPU: the K = D0 = 4 contraction is
    # too small to be worth an MXU push/pop, so unroll it as broadcast MACs.
    # (Exact f32; column/row splats are computed once per tile.)
    acc = w1T[:, 0:1] * xT[0:1, :]
    for k in range(1, d0):
        acc = acc + w1T[:, k:k + 1] * xT[k:k + 1, :]
    h = jnp.maximum(acc + b1_ref[...], 0.0)            # (D1, TM), f32

    # Layer 1 (Linear, no bias) on the MXU; TM sits on the stationary 256-wide
    # axis so the matmul stays cheap.  dropout(p=0) is the identity.
    oT = jnp.dot(w2T_ref[...], h, preferred_element_type=jnp.float32)  # (D2, TM)

    # XLU transpose to natural (TM, D2) layout: the output block is written
    # row-major directly, eliminating the post-kernel XLA transpose pass that
    # previously dominated end-to-end HBM traffic.
    o_ref[...] = oT.T.astype(o_ref.dtype)


def encoder_reference(x, w1, b1, w2):
    """Pure-JAX reference of the PyTorch forward (relu activation, dropout p=0)."""
    h = jnp.maximum(jnp.dot(x, w1) + b1, 0.0)
    return jnp.dot(h, w2)


def _encoder_forward_pallas(x2d, w1, b1, w2, *, block_m, out_dtype):
    M, D0 = x2d.shape
    D1 = w1.shape[1]
    D2 = w2.shape[1]

    # Lane-friendly tile size: multiple of 256; cap at ~M/2 so grid_m >= 2
    # whenever possible (lets dimension_semantics=("parallel",) use both v7x
    # TensorCores).  For tiny M, use a single exact block (no padding needed).
    block_m = max(256, _round_up(block_m, 256))
    if M < 256:
        tm = M
    else:
        tm = min(block_m, max(256, _round_up(_cdiv(M, 2), 256)))
    grid_m = _cdiv(M, tm)
    m_pad = grid_m * tm

    # Feature-major input (M on the lane axis): single layout pass (~32 B/row),
    # with the M-padding fused into the same copy.  Output needs NO padding:
    # the last output block is clipped by Pallas, so there is no post-slice.
    xT = x2d.T                                         # (D0, M)
    if m_pad != M:
        xT = jnp.pad(xT, ((0, 0), (0, m_pad - M)))     # (D0, m_pad)
    w1T = w1.T                                         # (D1, D0)
    b1c = b1.reshape(D1, 1)                            # (D1, 1)
    w2T = w2.T                                         # (D2, D1)

    flops = 2 * m_pad * (D0 * D1 + D1 * D2)
    bytes_accessed = (4 * (m_pad * D0 + D0 * D1 + D1 + D1 * D2)
                      + M * D2 * jnp.dtype(out_dtype).itemsize)

    return pl.pallas_call(
        _encoder_kernel,
        out_shape=jax.ShapeDtypeStruct((M, D2), out_dtype),
        grid_spec=pltpu.PrefetchScalarGridSpec(
            num_scalar_prefetch=0,
            grid=(grid_m,),
            in_specs=[
                pl.BlockSpec((D0, tm), lambda i: (0, i)),    # streamed x^T tile
                pl.BlockSpec((D1, D0), lambda i: (0, 0)),    # VMEM-resident W1^T
                pl.BlockSpec((D1, 1), lambda i: (0, 0)),     # VMEM-resident b1
                pl.BlockSpec((D2, D1), lambda i: (0, 0)),    # VMEM-resident W2^T
            ],
            out_specs=pl.BlockSpec((tm, D2), lambda i: (i, 0)),  # natural layout
        ),
        compiler_params=pltpu.CompilerParams(
            # Independent row tiles -> parallel (2-TC sharding on v7x).
            dimension_semantics=("parallel",),
            # Big tiles need more than the scoped default (16/32 MiB); 48 MiB
            # fits v7x's 64 MiB physical VMEM with headroom.
            vmem_limit_bytes=48 * 1024 * 1024,
        ),
        cost_estimate=pl.CostEstimate(
            flops=int(flops),
            transcendentals=0,
            bytes_accessed=int(bytes_accessed),
        ),
    )(xT, w1T, b1c, w2T)


def encoder_forward(x, w1, b1, w2, *, block_m=16384, min_rows_for_pallas=2048,
                    out_dtype=None):
    """Fused encoder forward:  y = relu(x @ W1 + b1) @ W2   (dropout p=0).

    x: (..., D0); rows M = prod(leading dims) are tiled with tile size <= block_m
    (rounded to a multiple of 256).  Small M dispatches to plain XLA where the
    fixed Pallas call / per-step overhead would dominate.
    """
    d0 = x.shape[-1]
    d2 = w2.shape[1]
    lead = x.shape[:-1]
    x2d = x.reshape(-1, d0)
    M = x2d.shape[0]
    out_dtype = x.dtype if out_dtype is None else jnp.dtype(out_dtype)

    if M < min_rows_for_pallas:
        out2d = encoder_reference(x2d, w1, b1, w2).astype(out_dtype)
    else:
        out2d = _encoder_forward_pallas(x2d, w1, b1, w2,
                                        block_m=block_m, out_dtype=out_dtype)
    return out2d.reshape(*lead, d2)


def init_params(key, shape):
    """Deterministic init of Linear weights, mirroring the module's layer shapes.

    shape = [D0, D1, D2] -> Linear(D0, D1, bias=True), Linear(D1, D2, bias=False)
    (bias = bool(j + 2 != len(shape)): first layer has bias, last does not.)
    """
    d0, d1, d2 = shape
    k1, k2, k3 = jax.random.split(key, 3)
    w1 = jax.random.normal(k1, (d0, d1), dtype=jnp.float32) * 0.1
    b1 = jax.random.normal(k2, (d1,), dtype=jnp.float32) * 0.1
    w2 = jax.random.normal(k3, (d1, d2), dtype=jnp.float32) * 0.1
    return w1, b1, w2


if __name__ == "__main__":
    # TODO(synk): RBF first layer (use_rbf=True) and non-zero dropout (training
    # mode, random mask) are not exercised; config uses use_rbf=False, drop_prob=0.
    shape = [4, 32, 64]          # params["shape"]
    N, T = 2, 8                  # batch=2, seq=8, input dim = shape[0] = 4

    key = jax.random.PRNGKey(0)
    kx, kp, kb = jax.random.split(key, 3)
    x = jax.random.normal(kx, (N, T, shape[0]), dtype=jnp.float32)
    w1, b1, w2 = init_params(kp, shape)

    # Small-shape check: force the Pallas path (single exact block, natural output).
    y = encoder_forward(x, w1, b1, w2, min_rows_for_pallas=0)
    y = jax.block_until_ready(y)
    y_ref = encoder_reference(x, w1, b1, w2)
    assert y.shape == (N, T, shape[-1]), y.shape
    assert jnp.allclose(y, y_ref, atol=1e-4, rtol=1e-4), "mismatch vs reference (small)"

    # Multi-tile + ragged-tail check: M not a multiple of the block, grid > 1,
    # last output block clipped by Pallas (no post-slice copy).
    xb = jax.random.normal(kb, (2065, shape[0]), dtype=jnp.float32)
    yb = encoder_forward(xb, w1, b1, w2, block_m=512, min_rows_for_pallas=0)
    yb = jax.block_until_ready(yb)
    yb_ref = encoder_reference(xb, w1, b1, w2)
    assert yb.shape == (2065, shape[-1]), yb.shape
    assert jnp.allclose(yb, yb_ref, atol=1e-4, rtol=1e-4), "mismatch vs reference (tiled)"

    print("KERNEL_OK")
</pallas_src>

<mosaic_0001>
module attributes {stable_mosaic.version = 11 : i64} {
  func.func @_encoder_kernel(%arg0: i32, %arg1: memref<4x16xf32, #tpu.memory_space<vmem>>, %arg2: memref<32x4xf32, #tpu.memory_space<vmem>>, %arg3: memref<32x1xf32, #tpu.memory_space<vmem>>, %arg4: memref<64x32xf32, #tpu.memory_space<vmem>>, %arg5: memref<16x64xf32, #tpu.memory_space<vmem>>) attributes {dimension_semantics = [#tpu.dimension_semantics<parallel>], iteration_bounds = array<i64: 1>, scalar_prefetch = 0 : i64, scratch_operands = 0 : i64, tpu.core_type = #tpu.core_type<tc>, window_params = [{transform_indices = @transform_0, window_bounds = array<i64: 4, 16>}, {pipeline_mode = #tpu.pipeline_mode<synchronous>, transform_indices = @transform_1, window_bounds = array<i64: 32, 4>}, {pipeline_mode = #tpu.pipeline_mode<synchronous>, transform_indices = @transform_2, window_bounds = array<i64: 32, 1>}, {pipeline_mode = #tpu.pipeline_mode<synchronous>, transform_indices = @transform_3, window_bounds = array<i64: 64, 32>}, {transform_indices = @transform_4, window_bounds = array<i64: 16, 64>}]} {
    %c0 = arith.constant 0 : index
    %c0_0 = arith.constant 0 : index
    %0 = vector.load %arg1[%c0, %c0_0] : memref<4x16xf32, #tpu.memory_space<vmem>>, vector<4x16xf32>
    %c0_1 = arith.constant 0 : index
    %c0_2 = arith.constant 0 : index
    %1 = vector.load %arg2[%c0_1, %c0_2] : memref<32x4xf32, #tpu.memory_space<vmem>>, vector<32x4xf32>
    %2 = vector.extract_strided_slice %1 {offsets = [0, 0], sizes = [32, 1], strides = [1, 1]} : vector<32x4xf32> to vector<32x1xf32>
    %3 = vector.extract_strided_slice %0 {offsets = [0, 0], sizes = [1, 16], strides = [1, 1]} : vector<4x16xf32> to vector<1x16xf32>
    %4 = vector.broadcast %2 : vector<32x1xf32> to vector<32x16xf32>
    %5 = vector.broadcast %3 : vector<1x16xf32> to vector<32x16xf32>
    %6 = arith.mulf %4, %5 : vector<32x16xf32>
    %7 = vector.extract_strided_slice %1 {offsets = [0, 1], sizes = [32, 1], strides = [1, 1]} : vector<32x4xf32> to vector<32x1xf32>
    %8 = vector.extract_strided_slice %0 {offsets = [1, 0], sizes = [1, 16], strides = [1, 1]} : vector<4x16xf32> to vector<1x16xf32>
    %9 = vector.broadcast %7 : vector<32x1xf32> to vector<32x16xf32>
    %10 = vector.broadcast %8 : vector<1x16xf32> to vector<32x16xf32>
    %11 = arith.mulf %9, %10 : vector<32x16xf32>
    %12 = arith.addf %6, %11 : vector<32x16xf32>
    %13 = vector.extract_strided_slice %1 {offsets = [0, 2], sizes = [32, 1], strides = [1, 1]} : vector<32x4xf32> to vector<32x1xf32>
    %14 = vector.extract_strided_slice %0 {offsets = [2, 0], sizes = [1, 16], strides = [1, 1]} : vector<4x16xf32> to vector<1x16xf32>
    %15 = vector.broadcast %13 : vector<32x1xf32> to vector<32x16xf32>
    %16 = vector.broadcast %14 : vector<1x16xf32> to vector<32x16xf32>
    %17 = arith.mulf %15, %16 : vector<32x16xf32>
    %18 = arith.addf %12, %17 : vector<32x16xf32>
    %19 = vector.extract_strided_slice %1 {offsets = [0, 3], sizes = [32, 1], strides = [1, 1]} : vector<32x4xf32> to vector<32x1xf32>
    %20 = vector.extract_strided_slice %0 {offsets = [3, 0], sizes = [1, 16], strides = [1, 1]} : vector<4x16xf32> to vector<1x16xf32>
    %21 = vector.broadcast %19 : vector<32x1xf32> to vector<32x16xf32>
    %22 = vector.broadcast %20 : vector<1x16xf32> to vector<32x16xf32>
    %23 = arith.mulf %21, %22 : vector<32x16xf32>
    %24 = arith.addf %18, %23 : vector<32x16xf32>
    %c0_3 = arith.constant 0 : index
    %c0_4 = arith.constant 0 : index
    %25 = vector.load %arg3[%c0_3, %c0_4] : memref<32x1xf32, #tpu.memory_space<vmem>>, vector<32x1xf32>
    %26 = vector.broadcast %25 : vector<32x1xf32> to vector<32x16xf32>
    %27 = arith.addf %24, %26 : vector<32x16xf32>
    %cst = arith.constant 0.000000e+00 : f32
    %28 = vector.broadcast %cst : f32 to vector<32x16xf32>
    %29 = arith.maximumf %27, %28 : vector<32x16xf32>
    %c0_5 = arith.constant 0 : index
    %c0_6 = arith.constant 0 : index
    %30 = vector.load %arg4[%c0_5, %c0_6] : memref<64x32xf32, #tpu.memory_space<vmem>>, vector<64x32xf32>
    %cst_7 = arith.constant dense<0.000000e+00> : vector<64x16xf32>
    %31 = tpu.matmul %30, %29, %cst_7 {dimension_numbers = #tpu.dot_dimension_numbers<[1], [0], [0], [1], [0, 0, 1, 1], [], []>} : vector<64x32xf32>, vector<32x16xf32>, vector<64x16xf32> -> vector<64x16xf32>
    %32 = tpu.transpose %31, [1, 0] : vector<64x16xf32> -> vector<16x64xf32>
    %c0_8 = arith.constant 0 : index
    %c0_9 = arith.constant 0 : index
    %33 = vector.load %arg5[%c0_8, %c0_9] : memref<16x64xf32, #tpu.memory_space<vmem>>, vector<16x64xf32>
    tpu.vector_store %arg5[%c0_8, %c0_9], %32 {strides = array<i32>} : memref<16x64xf32, #tpu.memory_space<vmem>>, vector<16x64xf32>,
    return
  }
  func.func @transform_0(%arg0: i32) -> (i32, i32) {
    %c0_i32 = arith.constant 0 : i32
    %c0_i32_0 = arith.constant 0 : i32
    return %c0_i32, %arg0 : i32, i32
  }
  func.func @transform_1(%arg0: i32) -> (i32, i32) {
    %c0_i32 = arith.constant 0 : i32
    %c0_i32_0 = arith.constant 0 : i32
    %c0_i32_1 = arith.constant 0 : i32
    return %c0_i32, %c0_i32_0 : i32, i32
  }
  func.func @transform_2(%arg0: i32) -> (i32, i32) {
    %c0_i32 = arith.constant 0 : i32
    %c0_i32_0 = arith.constant 0 : i32
    %c0_i32_1 = arith.constant 0 : i32
    return %c0_i32, %c0_i32_0 : i32, i32
  }
  func.func @transform_3(%arg0: i32) -> (i32, i32) {
    %c0_i32 = arith.constant 0 : i32
    %c0_i32_0 = arith.constant 0 : i32
    %c0_i32_1 = arith.constant 0 : i32
    return %c0_i32, %c0_i32_0 : i32, i32
  }
  func.func @transform_4(%arg0: i32) -> (i32, i32) {
    %c0_i32 = arith.constant 0 : i32
    %c0_i32_0 = arith.constant 0 : i32
    return %arg0, %c0_i32 : i32, i32
  }
}

</mosaic_0001>

<llo_original>
// kernel: tpu_custom_call.1
$region0: #{tpu_custom_call.1}
  #allocation0 [shape = 'u32[]', space=smem, size = 0x4, offset = 0x4, fixed_abs, tag = 'smem constant byte address 0x4 - core index']
  #allocation1 [shape = 'u32[144,128]{1,0:T(1,128)}', space=vmem, size = 0x12000, scoped, tag = 'internal scratch']
  %s0 = inlined_call_operand.vmem [shape: f32[4,16], index: 0, kind: input, shape index: {}]
  %s1 = inlined_call_operand.vmem [shape: f32[32,4], index: 1, kind: input, shape index: {}]
  %s2 = inlined_call_operand.vmem [shape: f32[32,1], index: 2, kind: input, shape index: {}]
  %s3 = inlined_call_operand.vmem [shape: f32[64,32], index: 3, kind: input, shape index: {}]
  %s4 = inlined_call_operand.hbm [shape: f32[16,64], index: 4, kind: output, shape index: {}]
  %s5 = sld [smem:[#allocation0]]
  $region26: #{tpu_custom_call.1} parent=0
    _
  %s7 = ssub.s32 1, %s5
  %s8 = scalar_select 0, %s7, %s5
  $region1: #{tpu_custom_call.1} parent=0
    #allocation2 [shape = 'u8[8192]{0}', space=vmem, size = 0x2000, scoped, tag = 'output window, operand 0, single buffered']
    #allocation3 [shape = 's32[1]{0}', space=sflag, size = 0x4, scoped, tag = 'scoped memory for tpu_custom_call.1']
    %9 = vsyncpa [#allocation3], 0
    // Predicated region
    $region2: #{tpu_custom_call.1} parent=1 // pred_check
      _
    $region3: #{tpu_custom_call.1} parent=1 // pred_check_branch
      %11 = sbr.rel (0) target = $region5
    $region4: #{tpu_custom_call.1} parent=1 // pred_region
      _
    $region5: #{tpu_custom_call.1} parent=1 // pred_fallthru
      _
    // Predicated region
    $region6: #{tpu_custom_call.1} parent=1 // pred_check
      _
    $region7: #{tpu_custom_call.1} parent=1 // pred_check_branch
      %13 = sbr.rel (0) target = $region9
    $region8: #{tpu_custom_call.1} parent=1 // pred_region
      _
    $region9: #{tpu_custom_call.1} parent=1 // pred_fallthru
      _
    // Predicated region
    $region10: #{tpu_custom_call.1} parent=1 // pred_check
      _
    $region11: #{tpu_custom_call.1} parent=1 // pred_check_branch
      %15 = sbr.rel (0) target = $region13
    $region12: #{tpu_custom_call.1} parent=1 // pred_region
      _
    $region13: #{tpu_custom_call.1} parent=1 // pred_fallthru
      _
    // Predicated region
    $region14: #{tpu_custom_call.1} parent=1 // pred_check
      _
    $region15: #{tpu_custom_call.1} parent=1 // pred_check_branch
      %17 = sbr.rel (0) target = $region17
    $region16: #{tpu_custom_call.1} parent=1 // pred_region
      _
    $region17: #{tpu_custom_call.1} parent=1 // pred_fallthru
      _
    %v18 = vld [vmem:[%s0] sm:$0xf]
    %v19 = vld [vmem:[%s1] sm:$0xff]
    %v20 = vld [vmem:[%s1 + $0x8] sm:$0xff]
    %v21 = vld [vmem:[%s1 + $0x10] sm:$0xff]
    %v22 = vld [vmem:[%s1 + $0x18] sm:$0xff]
    %24 = vset.pattern.permute.xlu0 0
    %25 = vperm.xlu0 %24, %v19
    %v26 = vpop.permute.xlu0 %25
    %29 = vset.pattern.permute.xlu0 0
    %30 = vperm.xlu0 %29, %v20
    %v31 = vpop.permute.xlu0 %30
    %34 = vset.pattern.permute.xlu0 0
    %35 = vperm.xlu0 %34, %v21
    %v36 = vpop.permute.xlu0 %35
    %39 = vset.pattern.permute.xlu0 0
    %40 = vperm.xlu0 %39, %v22
    %v41 = vpop.permute.xlu0 %40
    %v43 = vlaneseq
    %v44 = vshrl.u32 %v43, 7
    %v45 = vsub.s32 0, %v44
    %v46 = vrot.slane %v18, %v45
    %v47 = vmul.f32 %v26, %v46
    %v48 = vmul.f32 %v31, %v46
    %v49 = vmul.f32 %v36, %v46
    %v50 = vmul.f32 %v41, %v46
    %51 = vset.pattern.permute.xlu0 1
    %52 = vperm.xlu0 %51, %v19
    %v53 = vpop.permute.xlu0 %52
    %55 = vset.pattern.permute.xlu0 1
    %56 = vperm.xlu0 %55, %v20
    %v57 = vpop.permute.xlu0 %56
    %59 = vset.pattern.permute.xlu0 1
    %60 = vperm.xlu0 %59, %v21
    %v61 = vpop.permute.xlu0 %60
    %63 = vset.pattern.permute.xlu0 1
    %64 = vperm.xlu0 %63, %v22
    %v65 = vpop.permute.xlu0 %64
    %v67 = vlaneseq
    %v68 = vshrl.u32 %v67, 7
    %v69 = vsub.s32 1, %v68
    %v70 = vrot.slane %v18, %v69
    %v71 = vmul.f32 %v53, %v70
    %v72 = vmul.f32 %v57, %v70
    %v73 = vmul.f32 %v61, %v70
    %v74 = vmul.f32 %v65, %v70
    %v75 = vadd.f32 %v47, %v71
    %v76 = vadd.f32 %v48, %v72
    %v77 = vadd.f32 %v49, %v73
    %v78 = vadd.f32 %v50, %v74
    %79 = vset.pattern.permute.xlu0 2
    %80 = vperm.xlu0 %79, %v19
    %v81 = vpop.permute.xlu0 %80
    %83 = vset.pattern.permute.xlu0 2
    %84 = vperm.xlu0 %83, %v20
    %v85 = vpop.permute.xlu0 %84
    %87 = vset.pattern.permute.xlu0 2
    %88 = vperm.xlu0 %87, %v21
    %v89 = vpop.permute.xlu0 %88
    %91 = vset.pattern.permute.xlu0 2
    %92 = vperm.xlu0 %91, %v22
    %v93 = vpop.permute.xlu0 %92
    %v95 = vlaneseq
    %v96 = vshrl.u32 %v95, 7
    %v97 = vsub.s32 2, %v96
    %v98 = vrot.slane %v18, %v97
    %v99 = vmul.f32 %v81, %v98
    %v100 = vmul.f32 %v85, %v98
    %v101 = vmul.f32 %v89, %v98
    %v102 = vmul.f32 %v93, %v98
    %v103 = vadd.f32 %v75, %v99
    %v104 = vadd.f32 %v76, %v100
    %v105 = vadd.f32 %v77, %v101
    %v106 = vadd.f32 %v78, %v102
    %107 = vset.pattern.permute.xlu0 3
    %108 = vperm.xlu0 %107, %v19
    %v109 = vpop.permute.xlu0 %108
    %111 = vset.pattern.permute.xlu0 3
    %112 = vperm.xlu0 %111, %v20
    %v113 = vpop.permute.xlu0 %112
    %115 = vset.pattern.permute.xlu0 3
    %116 = vperm.xlu0 %115, %v21
    %v117 = vpop.permute.xlu0 %116
    %119 = vset.pattern.permute.xlu0 3
    %120 = vperm.xlu0 %119, %v22
    %v121 = vpop.permute.xlu0 %120
    %v123 = vlaneseq
    %v124 = vshrl.u32 %v123, 7
    %v125 = vsub.s32 3, %v124
    %v126 = vrot.slane %v18, %v125
    %v127 = vmul.f32 %v109, %v126
    %v128 = vmul.f32 %v113, %v126
    %v129 = vmul.f32 %v117, %v126
    %v130 = vmul.f32 %v121, %v126
    %v131 = vadd.f32 %v103, %v127
    %v132 = vadd.f32 %v104, %v128
    %v133 = vadd.f32 %v105, %v129
    %v134 = vadd.f32 %v106, %v130
    %v135 = vld [vmem:[%s2] sm:$0xff]
    %v136 = vld [vmem:[%s2 + $0x8] sm:$0xff]
    %v137 = vld [vmem:[%s2 + $0x10] sm:$0xff]
    %v138 = vld [vmem:[%s2 + $0x18] sm:$0xff]
    %140 = vset.pattern.permute.xlu0 0
    %141 = vperm.xlu0 %140, %v135
    %v142 = vpop.permute.xlu0 %141
    %145 = vset.pattern.permute.xlu0 0
    %146 = vperm.xlu0 %145, %v136
    %v147 = vpop.permute.xlu0 %146
    %150 = vset.pattern.permute.xlu0 0
    %151 = vperm.xlu0 %150, %v137
    %v152 = vpop.permute.xlu0 %151
    %155 = vset.pattern.permute.xlu0 0
    %156 = vperm.xlu0 %155, %v138
    %v157 = vpop.permute.xlu0 %156
    %v159 = vadd.f32 %v131, %v142
    %v160 = vadd.f32 %v132, %v147
    %v161 = vadd.f32 %v133, %v152
    %v162 = vadd.f32 %v134, %v157
    %v163 = vmax.f32 %v159, 0.0
    %v164 = vmax.f32 %v160, 0.0
    %v165 = vmax.f32 %v161, 0.0
    %v166 = vmax.f32 %v162, 0.0
    %v167 = vld [vmem:[%s3] sm:$0xff]
    %v168 = vld [vmem:[%s3 + $0x8] sm:$0xff]
    %v169 = vld [vmem:[%s3 + $0x10] sm:$0xff]
    %v170 = vld [vmem:[%s3 + $0x18] sm:$0xff]
    %v171 = vld [vmem:[%s3 + $0x20] sm:$0xff]
    %v172 = vld [vmem:[%s3 + $0x28] sm:$0xff]
    %v173 = vld [vmem:[%s3 + $0x30] sm:$0xff]
    %v174 = vld [vmem:[%s3 + $0x38] sm:$0xff]
    %vm175 = vcmask 261120
    %v177 = vsel %vm175, %v167, 0
    %v180 = vsel %vm175, %v168, 0
    %v183 = vsel %vm175, %v169, 0
    %v186 = vsel %vm175, %v170, 0
    %v189 = vsel %vm175, %v171, 0
    %v192 = vsel %vm175, %v172, 0
    %v195 = vsel %vm175, %v173, 0
    %v198 = vsel %vm175, %v174, 0
    %200 = vmatprep.subr.mxu0 0.0
    %201 = vmatpush1.msra.mxu0 0.0
    %202 = vmatprep.subr.mxu0 0.0
    %203 = vmatpush1.msra.mxu0 0.0
    %204 = vmatprep.subr.mxu0 0.0
    %205 = vmatpush1.msra.mxu0 0.0
    %206 = vmatprep.subr.mxu0 0.0
    %207 = vmatpush1.msra.mxu0 0.0
    %208 = vmatprep.subr.mxu0 0.0
    %209 = vmatpush1.msra.mxu0 0.0
    %210 = vmatprep.subr.mxu0 0.0
    %211 = vmatpush1.msra.mxu0 0.0
    %212 = vmatprep.subr.mxu0 0.0
    %213 = vmatpush1.msra.mxu0 0.0
    %214 = vmatprep.subr.mxu0 0.0
    %215 = vmatpush1.msra.mxu0 0.0
    %216 = vmatprep.subr.mxu0 0.0
    %217 = vmatpush1.msra.mxu0 0.0
    %218 = vmatprep.subr.mxu0 0.0
    %219 = vmatpush1.msra.mxu0 0.0
    %220 = vmatprep.subr.mxu0 0.0
    %221 = vmatpush1.msra.mxu0 0.0
    %222 = vmatprep.subr.mxu0 0.0
    %223 = vmatpush1.msra.mxu0 0.0
    %224 = vmatprep.subr.mxu0 0.0
    %225 = vmatpush1.msra.mxu0 %v166
    %226 = vmatprep.subr.mxu0 0.0
    %227 = vmatpush1.msra.mxu0 %v165
    %228 = vmatprep.subr.mxu0 0.0
    %229 = vmatpush1.msra.mxu0 %v164
    %230 = vmatprep.subr.mxu0 0.0
    %231 = vmatpush1.msra.mxu0 %v163
    %232 = vmatprep.subr.mxu0 0.0
    %233 = vmatpush2.msra.mxu0 0.0
    %234 = vmatprep.subr.mxu0 0.0
    %235 = vmatpush2.msra.mxu0 0.0
    %236 = vmatprep.subr.mxu0 0.0
    %237 = vmatpush2.msra.mxu0 0.0
    %238 = vmatprep.subr.mxu0 0.0
    %239 = vmatpush2.msra.mxu0 0.0
    %240 = vmatprep.subr.mxu0 0.0
    %241 = vmatpush2.msra.mxu0 0.0
    %242 = vmatprep.subr.mxu0 0.0
    %243 = vmatpush2.msra.mxu0 0.0
    %244 = vmatprep.subr.mxu0 0.0
    %245 = vmatpush2.msra.mxu0 0.0
    %246 = vmatprep.subr.mxu0 0.0
    %247 = vmatpush2.msra.mxu0 0.0
    %248 = vmatprep.subr.mxu0 0.0
    %249 = vmatpush2.msra.mxu0 0.0
    %250 = vmatprep.subr.mxu0 0.0
    %251 = vmatpush2.msra.mxu0 0.0
    %252 = vmatprep.subr.mxu0 0.0
    %253 = vmatpush2.msra.mxu0 0.0
    %254 = vmatprep.subr.mxu0 0.0
    %255 = vmatpush2.msra.mxu0 0.0
    %256 = vmatprep.subr.mxu0 0.0
    %257 = vmatpush2.msra.mxu0 0.0
    %258 = vmatprep.subr.mxu0 0.0
    %259 = vmatpush2.msra.mxu0 0.0
    %260 = vmatprep.subr.mxu0 0.0
    %261 = vmatpush2.msra.mxu0 0.0
    %262 = vmatprep.subr.mxu0 0.0
    %263 = vmatpush2.msra.mxu0 0.0
    %264 = vmatprep.mubr.f32.mxu0 0.0
    %265 = vmatmul.mubr.f32.gmra.mxu0 %v177
    %v266 = vpop.f32.mrf.mxu0
    %v267 = vadd.f32 0.0, %v266
    %v268 = vpop.f32.mrf.mxu0
    %269 = vmatprep.mubr.f32.mxu0 0.0
    %270 = vmatmul.mubr.f32.gmra.mxu0 %v180
    %v271 = vpop.f32.mrf.mxu0
    %v272 = vadd.f32 0.0, %v271
    %v273 = vpop.f32.mrf.mxu0
    %274 = vmatprep.mubr.f32.mxu0 0.0
    %275 = vmatmul.mubr.f32.gmra.mxu0 %v183
    %v276 = vpop.f32.mrf.mxu0
    %v277 = vadd.f32 0.0, %v276
    %v278 = vpop.f32.mrf.mxu0
    %279 = vmatprep.mubr.f32.mxu0 0.0
    %280 = vmatmul.mubr.f32.gmra.mxu0 %v186
    %v281 = vpop.f32.mrf.mxu0
    %v282 = vadd.f32 0.0, %v281
    %v283 = vpop.f32.mrf.mxu0
    %284 = vmatprep.mubr.f32.mxu0 0.0
    %285 = vmatmul.mubr.f32.gmra.mxu0 %v189
    %v286 = vpop.f32.mrf.mxu0
    %v287 = vadd.f32 0.0, %v286
    %v288 = vpop.f32.mrf.mxu0
    %289 = vmatprep.mubr.f32.mxu0 0.0
    %290 = vmatmul.mubr.f32.gmra.mxu0 %v192
    %v291 = vpop.f32.mrf.mxu0
    %v292 = vadd.f32 0.0, %v291
    %v293 = vpop.f32.mrf.mxu0
    %294 = vmatprep.mubr.f32.mxu0 0.0
    %295 = vmatmul.mubr.f32.gmra.mxu0 %v195
    %v296 = vpop.f32.mrf.mxu0
    %v297 = vadd.f32 0.0, %v296
    %v298 = vpop.f32.mrf.mxu0
    %299 = vmatprep.mubr.f32.mxu0 0.0
    %300 = vmatmul.mubr.f32.gmra.mxu0 %v198
    %v301 = vpop.f32.mrf.mxu0
    %v302 = vadd.f32 0.0, %v301
    %v303 = vpop.f32.mrf.mxu0
    %304 = vdwg.mxu0
    %305 = vxpose.xlu0.b32.start [1/16] %v267, 128
    %306 = vxpose.xlu0.b32.cont [2/16] %v272, 128
    %307 = vxpose.xlu0.b32.cont [3/16] %v277, 128
    %308 = vxpose.xlu0.b32.cont [4/16] %v282, 128
    %309 = vxpose.xlu0.b32.cont [5/16] %v287, 128
    %310 = vxpose.xlu0.b32.cont [6/16] %v292, 128
    %311 = vxpose.xlu0.b32.cont [7/16] %v297, 128
    %312 = vxpose.xlu0.b32.cont [8/16] %v302, 128
    %313 = vxpose.xlu0.b32.cont [9/16] 0.0, 128
    %314 = vxpose.xlu0.b32.cont [10/16] 0.0, 128
    %315 = vxpose.xlu0.b32.cont [11/16] 0.0, 128
    %316 = vxpose.xlu0.b32.cont [12/16] 0.0, 128
    %317 = vxpose.xlu0.b32.cont [13/16] 0.0, 128
    %318 = vxpose.xlu0.b32.cont [14/16] 0.0, 128
    %319 = vxpose.xlu0.b32.cont [15/16] 0.0, 128
    %320 = vxpose.xlu0.b32.end [16/16] 0.0, 128
    %v321 = vpop.trf.xlu0
    %v322 = vpop.trf.xlu0
    %v323 = vpop.trf.xlu0
    %v324 = vpop.trf.xlu0
    %v325 = vpop.trf.xlu0
    %v326 = vpop.trf.xlu0
    %v327 = vpop.trf.xlu0
    %v328 = vpop.trf.xlu0
    %v329 = vpop.trf.xlu0
    %v330 = vpop.trf.xlu0
    %v331 = vpop.trf.xlu0
    %v332 = vpop.trf.xlu0
    %v333 = vpop.trf.xlu0
    %v334 = vpop.trf.xlu0
    %v335 = vpop.trf.xlu0
    %v336 = vpop.trf.xlu0
    %vm337 = vcmask 523264
    %338 = vst.msk [vmem:[#allocation2] sm:$0xff] %vm337, %v321
    %339 = vst.msk [vmem:[#allocation2 + $0x8] sm:$0xff] %vm337, %v322
    // Predicated region
    $region18: #{tpu_custom_call.1} parent=1 // pred_check
      _
    $region19: #{tpu_custom_call.1} parent=1 // pred_check_branch
      %341 = sbr.rel (0) target = $region21
    $region20: #{tpu_custom_call.1} parent=1 // pred_region
      %s343 = ssub.s32 256, 256
      %344 = vsyncadd [#allocation3], %s343
      %s345 = sshll.u32 [#allocation2], 4
      %s346 = int_to_ptr.vmem [resolvable:$true] %s345
      %351 = dma.vmem_to_hbm [thread:$0]  %s346, 256, %s4, [#allocation3], 128, 128, 8
    $region21: #{tpu_custom_call.1} parent=1 // pred_fallthru
      _
    // Predicated region
    $region22: #{tpu_custom_call.1} parent=1 // pred_check
      _
    $region23: #{tpu_custom_call.1} parent=1 // pred_check_branch
      %353 = sbr.rel (0) target = $region25
    $region24: #{tpu_custom_call.1} parent=1 // pred_region
      %354 = dma.done [#allocation3], 256
    $region25: #{tpu_custom_call.1} parent=1 // pred_fallthru
      _
    %355 = vsyncpa [#allocation3], 1

</llo_original>
